<compile_context>
chip_gen: v7x
topology: tpu7x:2x2x1
jax: 0.10.0
libtpu: 0.0.40
codegen_flags: <defaults>
</compile_context>

<pallas_src>
import functools
import math

import numpy as np
import jax
import jax.numpy as jnp
from jax import lax
from jax.experimental import pallas as pl
from jax.experimental.pallas import tpu as pltpu


# ---------------------------------------------------------------------------
# Pallas kernel: l_neg tile = (q @ bank_tile^T) / T
# ---------------------------------------------------------------------------
def _lneg_kernel(q_ref, mem_ref, lneg_ref, *, inv_t):
    # (B, D) x (tile_q, D) contracting the LAST dims of both operands -> (B, tile_q)
    # on the MXU, accumulated in f32. No in-kernel transpose / XLU relayout of the
    # streamed bank tile; the output tile is lane-dense (tile_q >= 128).
    lneg_ref[...] = (
        lax.dot_general(
            q_ref[...],
            mem_ref[...],
            dimension_numbers=(((1,), (1,)), ((), ())),
            preferred_element_type=jnp.float32,
        )
        * inv_t
    )


# ---------------------------------------------------------------------------
# Padding-aware, generation-aware tile selection.
# ---------------------------------------------------------------------------
def _pad_up(x, m):
    return ((x + m - 1) // m) * m


def _sublane_multiple(itemsize):
    # vreg packing: 4B dtypes tile as (8,128), 2B as (16,128), 1B as (32,128).
    return {4: 8, 2: 16, 1: 32}.get(int(itemsize), 8)


def _block_vmem_bytes(rows, cols, itemsize, n_buffers=2):
    # Real (padded) VMEM footprint of one pipelined block: rows padded to the
    # dtype sublane multiple, cols padded to the 128-lane width, double-buffered.
    return (
        n_buffers
        * _pad_up(max(int(rows), 1), _sublane_multiple(itemsize))
        * _pad_up(max(int(cols), 1), 128)
        * int(itemsize)
    )


def _vmem_capacity_bytes():
    try:
        return int(pltpu.get_tpu_info().vmem_capacity_bytes)
    except Exception:
        return 64 << 20  # conservative default: v7x per-TensorCore VMEM


def _choose_tile_q(Q, D, B, bank_itemsize, q_itemsize):
    """Pick the queue tile and a matching vmem_limit_bytes.

    * Uses padded (sublane, 128-lane) footprints, including the double-buffered
      f32 output block and the resident q block, so the estimate matches real
      VMEM use even for small D.
    * Budget derives from the actual chip's VMEM capacity (v5e/v6e 128 MiB,
      v7x 64 MiB per TC), capped to leave headroom for compiler scratch.
    * Never returns a single-step grid for banks >= 256 rows so the DMA/compute
      pipeline (and megacore sharding on v7x) stays engaged.
    """
    capacity = _vmem_capacity_bytes()
    budget = min(capacity // 2, 40 << 20)

    fixed = _block_vmem_bytes(B, D, q_itemsize, 2)  # resident q block

    if Q >= 512:
        min_steps = 4
    elif Q >= 256:
        min_steps = 2
    else:
        min_steps = 1

    tile = None
    for cand in (32768, 16384, 8192, 4096, 2048, 1024, 512, 256, 128):
        if Q % cand:
            continue
        if Q // cand < min_steps:
            continue
        need = (
            fixed
            + _block_vmem_bytes(cand, D, bank_itemsize, 2)  # streamed bank tile
            + _block_vmem_bytes(B, cand, 4, 2)              # streamed f32 output tile
        )
        if need <= budget:
            tile = cand
            break
    if tile is None:
        # Tiny or oddly-sized banks: smallest aligned tile, or full-extent block.
        tile = 128 if Q % 128 == 0 else Q

    need = (
        fixed
        + _block_vmem_bytes(tile, D, bank_itemsize, 2)
        + _block_vmem_bytes(B, tile, 4, 2)
    )
    vmem_limit = int(min(capacity, max(need + (8 << 20), 32 << 20)))
    return tile, vmem_limit


# ---------------------------------------------------------------------------
# Public entry points
# ---------------------------------------------------------------------------
def memory_vclr_logits(q, k, memory, *, temperature=0.1, tile_q=None):
    """Returns (l_pos, l_neg), both already divided by T.

    Perf-sensitive callers (e.g. cross-entropy with label 0) should consume
    these directly; memory_vclr_forward only concatenates them for parity with
    the PyTorch module's single (B, 1 + queue_size) output.
    """
    B, D = q.shape
    Q, D2 = memory.shape
    assert D == D2, "feature_dim mismatch between q and memory"
    inv_t = float(1.0 / temperature)

    # Stream the bank in its *stored* dtype (keep the bank persistently in bf16
    # to halve HBM bytes on the dominant stream); no per-call astype pass over
    # the (Q, D) bank here. Only the tiny (B, D) q is cast to match the MXU.
    q_mm = q.astype(memory.dtype) if q.dtype != memory.dtype else q

    bank_itemsize = jnp.dtype(memory.dtype).itemsize
    q_itemsize = jnp.dtype(q_mm.dtype).itemsize

    if tile_q is None:
        tile_q, vmem_limit = _choose_tile_q(Q, D, B, bank_itemsize, q_itemsize)
    else:
        assert Q % tile_q == 0, "queue_size must be a multiple of tile_q"
        need = (
            _block_vmem_bytes(B, D, q_itemsize, 2)
            + _block_vmem_bytes(tile_q, D, bank_itemsize, 2)
            + _block_vmem_bytes(B, tile_q, 4, 2)
        )
        vmem_limit = int(min(_vmem_capacity_bytes(), max(need + (8 << 20), 32 << 20)))

    grid = (Q // tile_q,)

    # Advisory cost hint so XLA schedules the surrounding ops (l_pos reduce,
    # queue update) around this long HBM-bound custom call.
    cost = pl.CostEstimate(
        flops=2 * B * Q * D,
        transcendentals=0,
        bytes_accessed=Q * D * bank_itemsize + B * D * q_itemsize + B * Q * 4,
    )

    l_neg = pl.pallas_call(
        functools.partial(_lneg_kernel, inv_t=inv_t),
        out_shape=jax.ShapeDtypeStruct((B, Q), jnp.float32),
        grid_spec=pltpu.PrefetchScalarGridSpec(
            num_scalar_prefetch=0,
            grid=grid,
            in_specs=[
                pl.BlockSpec((B, D), lambda j: (0, 0)),        # q: small, resident
                pl.BlockSpec((tile_q, D), lambda j: (j, 0)),   # bank: streamed tiles
            ],
            out_specs=pl.BlockSpec((B, tile_q), lambda j: (0, j)),  # lane-dense tiles
        ),
        compiler_params=pltpu.CompilerParams(
            # Each grid step owns a distinct output tile -> queue axis is fully
            # parallel (megacore-shardable on v7x; harmless on v5e/v6e).
            dimension_semantics=("parallel",),
            vmem_limit_bytes=vmem_limit,
        ),
        cost_estimate=cost,
    )(q_mm, memory)

    # Positive logit: tiny per-row VPU reduce. stop_gradient(k) mirrors the
    # module's k.detach() (forward values identical; grads blocked through k).
    l_pos = jnp.sum(q * lax.stop_gradient(k), axis=-1, keepdims=True) * inv_t
    return l_pos, l_neg


def memory_vclr_forward(q, k, k_all, memory, index, *, temperature=0.1, tile_q=None):
    """Full MemoryVCLR.forward: returns (out, new_memory, new_index).

    `index` is a traced int32 scalar (NOT static), so a jitted training step
    compiles once and is reused for every circular-queue position. Jit this
    with donate_argnums on `memory` so the queue update happens in place.
    """
    Q = memory.shape[0]
    all_size = k_all.shape[0]
    assert all_size <= Q  # same assumption as the PyTorch original

    l_pos, l_neg = memory_vclr_logits(
        q, k, memory, temperature=temperature, tile_q=tile_q
    )

    # Module parity: single concatenated logits tensor. This is one extra
    # read+write pass over the (B, Q) logits; callers that can consume
    # (l_pos, l_neg) separately should call memory_vclr_logits and skip it.
    out = jnp.concatenate([l_pos, l_neg], axis=1)

    # Circular queue update (torch index_copy_ equivalent). Shape-static in
    # `index`; wrap-around handled by the modulo on the row ids, in place when
    # `memory` is donated.
    index = jnp.asarray(index, dtype=jnp.int32)
    out_ids = jnp.mod(jnp.arange(all_size, dtype=jnp.int32) + index, Q)
    new_memory = memory.at[out_ids].set(k_all.astype(memory.dtype))
    new_index = jnp.mod(index + all_size, Q)
    return out, new_memory, new_index


def memory_vclr_reference(q, k, k_all, memory, index, *, temperature=0.1):
    """Pure-JAX reference mirroring the PyTorch forward."""
    Q = memory.shape[0]
    l_pos = jnp.sum(q * k, axis=-1, keepdims=True)
    l_neg = q @ memory.astype(q.dtype).T
    out = jnp.concatenate([l_pos, l_neg], axis=1) / temperature
    all_size = k_all.shape[0]
    index = jnp.asarray(index, dtype=jnp.int32)
    out_ids = jnp.mod(jnp.arange(all_size, dtype=jnp.int32) + index, Q)
    new_memory = memory.at[out_ids].set(k_all.astype(memory.dtype))
    new_index = jnp.mod(index + all_size, Q)
    return out, new_memory, new_index


if __name__ == "__main__":
    # Small, deterministic shapes consistent with the module's forward.
    B = 8      # batch of query/key features
    D = 32     # feature_dim
    Q = 256    # queue_size
    temperature = 0.1

    key = jax.random.PRNGKey(0)
    kq, kk, kka, kmem = jax.random.split(key, 4)
    q = jax.random.normal(kq, (B, D), dtype=jnp.float32)
    k = jax.random.normal(kk, (B, D), dtype=jnp.float32)
    k_all = jax.random.normal(kka, (B, D), dtype=jnp.float32)

    # torch init parity: uniform in [-stdv, stdv], stdv = 1/sqrt(feature_dim/3)
    stdv = 1.0 / math.sqrt(D / 3.0)
    memory = jax.random.uniform(
        kmem, (Q, D), dtype=jnp.float32, minval=-stdv, maxval=stdv
    )

    # jit once; `index` (arg 4) is traced, `memory` (arg 3) is donated so the
    # circular update is in place. No retrace when index changes step to step.
    fwd = jax.jit(
        memory_vclr_forward,
        static_argnames=("temperature", "tile_q"),
        donate_argnums=(3,),
    )

    # --- step 1: index = 0 --------------------------------------------------
    idx0 = jnp.array(0, dtype=jnp.int32)
    ref_out, ref_mem, ref_idx = memory_vclr_reference(
        q, k, k_all, memory, idx0, temperature=temperature
    )
    jax.block_until_ready((ref_out, ref_mem))

    out, new_mem, new_idx = fwd(
        q, k, k_all, jnp.array(memory), idx0, temperature=temperature
    )
    jax.block_until_ready((out, new_mem, new_idx))

    np.testing.assert_allclose(np.asarray(out), np.asarray(ref_out),
                               rtol=1e-5, atol=1e-5)
    np.testing.assert_allclose(np.asarray(new_mem), np.asarray(ref_mem),
                               rtol=1e-6, atol=1e-6)
    assert int(new_idx) == int(ref_idx)

    # --- step 2: wrap-around index, same compiled function (no retrace) ------
    idx1 = jnp.array(Q - 4, dtype=jnp.int32)   # forces wrap in the queue update
    ref_out2, ref_mem2, ref_idx2 = memory_vclr_reference(
        q, k, k_all, new_mem, idx1, temperature=temperature
    )
    jax.block_until_ready((ref_out2, ref_mem2))

    out2, mem2, idx2 = fwd(q, k, k_all, new_mem, idx1, temperature=temperature)
    jax.block_until_ready((out2, mem2, idx2))

    np.testing.assert_allclose(np.asarray(out2), np.asarray(ref_out2),
                               rtol=1e-5, atol=1e-5)
    np.testing.assert_allclose(np.asarray(mem2), np.asarray(ref_mem2),
                               rtol=1e-6, atol=1e-6)
    assert int(idx2) == int(ref_idx2)

    # --- bf16 bank: persistent reduced-precision storage ---------------------
    # (one-time conversion; the kernel streams the bank in bf16 directly, with
    # no per-call astype pass, halving HBM bytes on the dominant stream)
    mem_bf16 = memory.astype(jnp.bfloat16)
    l_pos_b, l_neg_b = memory_vclr_logits(q, k, mem_bf16, temperature=temperature)
    jax.block_until_ready(l_neg_b)
    ref_lneg_b = (q @ mem_bf16.astype(jnp.float32).T) / temperature
    np.testing.assert_allclose(np.asarray(l_neg_b), np.asarray(ref_lneg_b),
                               rtol=5e-2, atol=2.5e-1)
    np.testing.assert_allclose(
        np.asarray(l_pos_b),
        np.asarray(jnp.sum(q * k, axis=-1, keepdims=True) / temperature),
        rtol=1e-5, atol=1e-5,
    )

    print("KERNEL_OK")
</pallas_src>

<mosaic_0001>
module attributes {stable_mosaic.version = 11 : i64} {
  func.func @_lneg_kernel(%arg0: i32, %arg1: memref<8x32xf32, #tpu.memory_space<vmem>>, %arg2: memref<128x32xf32, #tpu.memory_space<vmem>>, %arg3: memref<8x128xf32, #tpu.memory_space<vmem>>) attributes {dimension_semantics = [#tpu.dimension_semantics<parallel>], iteration_bounds = array<i64: 2>, scalar_prefetch = 0 : i64, scratch_operands = 0 : i64, tpu.core_type = #tpu.core_type<tc>, window_params = [{pipeline_mode = #tpu.pipeline_mode<synchronous>, transform_indices = @transform_0, window_bounds = array<i64: 8, 32>}, {transform_indices = @transform_1, window_bounds = array<i64: 128, 32>}, {transform_indices = @transform_2, window_bounds = array<i64: 8, 128>}]} {
    %c0 = arith.constant 0 : index
    %c0_0 = arith.constant 0 : index
    %0 = vector.load %arg1[%c0, %c0_0] : memref<8x32xf32, #tpu.memory_space<vmem>>, vector<8x32xf32>
    %c0_1 = arith.constant 0 : index
    %c0_2 = arith.constant 0 : index
    %1 = vector.load %arg2[%c0_1, %c0_2] : memref<128x32xf32, #tpu.memory_space<vmem>>, vector<128x32xf32>
    %cst = arith.constant dense<0.000000e+00> : vector<8x128xf32>
    %2 = tpu.matmul %0, %1, %cst {dimension_numbers = #tpu.dot_dimension_numbers<[1], [1], [0], [0], [0, 0, 1, 0], [], []>} : vector<8x32xf32>, vector<128x32xf32>, vector<8x128xf32> -> vector<8x128xf32>
    %cst_3 = arith.constant 1.000000e+01 : f32
    %3 = vector.broadcast %cst_3 : f32 to vector<8x128xf32>
    %4 = arith.mulf %2, %3 : vector<8x128xf32>
    %c0_4 = arith.constant 0 : index
    %c0_5 = arith.constant 0 : index
    %5 = vector.load %arg3[%c0_4, %c0_5] : memref<8x128xf32, #tpu.memory_space<vmem>>, vector<8x128xf32>
    tpu.vector_store %arg3[%c0_4, %c0_5], %4 {strides = array<i32>} : memref<8x128xf32, #tpu.memory_space<vmem>>, vector<8x128xf32>,
    return
  }
  func.func @transform_0(%arg0: i32) -> (i32, i32) {
    %c0_i32 = arith.constant 0 : i32
    %c0_i32_0 = arith.constant 0 : i32
    %c0_i32_1 = arith.constant 0 : i32
    return %c0_i32, %c0_i32_0 : i32, i32
  }
  func.func @transform_1(%arg0: i32) -> (i32, i32) {
    %c0_i32 = arith.constant 0 : i32
    %c0_i32_0 = arith.constant 0 : i32
    return %arg0, %c0_i32 : i32, i32
  }
  func.func @transform_2(%arg0: i32) -> (i32, i32) {
    %c0_i32 = arith.constant 0 : i32
    %c0_i32_0 = arith.constant 0 : i32
    return %c0_i32, %arg0 : i32, i32
  }
}

</mosaic_0001>

<llo_original>
// kernel: memory_vclr_forward.1
$region0: #{memory_vclr_forward.1}
  #allocation0 [shape = 'u32[]', space=smem, size = 0x4, offset = 0x4, fixed_abs, tag = 'smem constant byte address 0x4 - core index']
  #allocation1 [shape = 'u32[144,128]{1,0:T(1,128)}', space=vmem, size = 0x12000, scoped, tag = 'internal scratch']
  %s0 = inlined_call_operand.vmem [shape: f32[8,32], index: 0, kind: input, shape index: {}]
  %s1 = inlined_call_operand.vmem [shape: f32[256,32], index: 1, kind: input, shape index: {}]
  %s2 = inlined_call_operand.vmem [shape: f32[8,256], index: 2, kind: output, shape index: {}]
  %s3 = sld [smem:[#allocation0]]
  $region41: #{memory_vclr_forward.1} parent=0
    _
  %s5 = ssub.s32 1, %s3
  %s6 = scalar_select 0, %s5, %s3
  loop: start=0, step=1, limit=4
  $region2: #{memory_vclr_forward.1} parent=0 // loop_pre_header
    _
  $region3: #{memory_vclr_forward.1} parent=0 // loop_header
    %s8 = sphi 0, %s12
    %p9 = scmp.ge.s32.totalorder %s8, 4
    %s16 = sphi 0, %s16
    %s18 = sphi 0, %s16
    %s19 = sphi 0, %s18
    %s33 = sphi 0, %s19
    %s39 = sphi 0, %s41
    %s42 = sphi 0, %s39
    %s43 = sphi 0, %s42
    %s59 = sphi 0, %s43
    %s65 = sphi 0, %s67
    %s68 = sphi 0, %s65
    %s69 = sphi 0, %s68
    %s85 = sphi 0, %s69
  $region4: #{memory_vclr_forward.1} parent=0 // loop_header_branch
    %11 = sbr.rel (%p9) target = $region8
  $region5: #{memory_vclr_forward.1} parent=0 // loop_body
    %s13 = ssub.s32 %s8, 1
    %s14 = ssub.s32 %s8, 2
    %s15 = sadd.s32 %s8, 1
    %s17 = sadd.s32 %s16, 1
    %p20 = scmp.eq.s32.totalorder %s8, 1
    %p21 = scmp.ne.s32.totalorder %s16, %s18
    %p22 = scmp.eq.s32.totalorder %s8, 0
    %p23 = por %p21, %p22
    %p24 = scmp.ne.s32.totalorder %s16, %s18
    %p25 = scmp.eq.s32.totalorder %s13, 1
    %p26 = por %p24, %p25
    %p27 = scmp.ne.s32.totalorder %s18, %s19
    %p28 = scmp.eq.s32.totalorder %s13, 0
    %p29 = por %p27, %p28
    %p30 = scmp.ne.s32.totalorder %s18, %s19
    %p31 = scmp.eq.s32.totalorder %s14, 1
    %p32 = por %p30, %p31
    %p34 = scmp.ne.s32.totalorder %s19, %s33
    %p35 = scmp.eq.s32.totalorder %s14, 0
    %p36 = por %p34, %p35
    %s37 = ssub.s32 %s8, %s15
    %p38 = scmp.eq.s32.totalorder %s37, 0
    %s40 = sadd.s32 %s39, 1
    %s41 = scalar_select %p38, %s39, %s40
    %p44 = pneg %p38
    %p45 = scmp.eq.s32.totalorder %s8, 1
    %p46 = por %p44, %p45
    %p47 = scmp.ne.s32.totalorder %s39, %s42
    %p48 = scmp.eq.s32.totalorder %s8, 0
    %p49 = por %p47, %p48
    %p50 = scmp.ne.s32.totalorder %s39, %s42
    %p51 = scmp.eq.s32.totalorder %s13, 1
    %p52 = por %p50, %p51
    %p53 = scmp.ne.s32.totalorder %s42, %s43
    %p54 = scmp.eq.s32.totalorder %s13, 0
    %p55 = por %p53, %p54
    %p56 = scmp.ne.s32.totalorder %s42, %s43
    %p57 = scmp.eq.s32.totalorder %s14, 1
    %p58 = por %p56, %p57
    %p60 = scmp.ne.s32.totalorder %s43, %s59
    %p61 = scmp.eq.s32.totalorder %s14, 0
    %p62 = por %p60, %p61
    %s63 = ssub.s32 %s8, %s15
    %p64 = scmp.eq.s32.totalorder %s63, 0
    %s66 = sadd.s32 %s65, 1
    %s67 = scalar_select %p64, %s65, %s66
    %p70 = pneg %p64
    %p71 = scmp.eq.s32.totalorder %s8, 1
    %p72 = por %p70, %p71
    %p73 = scmp.ne.s32.totalorder %s65, %s68
    %p74 = scmp.eq.s32.totalorder %s8, 0
    %p75 = por %p73, %p74
    %p76 = scmp.ne.s32.totalorder %s65, %s68
    %p77 = scmp.eq.s32.totalorder %s13, 1
    %p78 = por %p76, %p77
    %p79 = scmp.ne.s32.totalorder %s68, %s69
    %p80 = scmp.eq.s32.totalorder %s13, 0
    %p81 = por %p79, %p80
    %p82 = scmp.ne.s32.totalorder %s68, %s69
    %p83 = scmp.eq.s32.totalorder %s14, 1
    %p84 = por %p82, %p83
    %p86 = scmp.ne.s32.totalorder %s69, %s85
    %p87 = scmp.eq.s32.totalorder %s14, 0
    %p88 = por %p86, %p87
    %p89 = scmp.le.s32.totalorder 1, %s8
    %p90 = scmp.lt.s32.totalorder %s8, 3
    %p91 = pnand %p89, %p90
    %p92 = pneg %p91
    // Predicated region
    $region9: #{memory_vclr_forward.1} parent=5 // pred_check
      _
    $region10: #{memory_vclr_forward.1} parent=5 // pred_check_branch
      %94 = sbr.rel (%p91) target = $region12
    $region11: #{memory_vclr_forward.1} parent=5 // pred_region
      %s95 = ssub.s32 %s8, 1
      // Predicated region
      $region13: #{memory_vclr_forward.1} parent=11 // pred_check
        %p96 = pneg %p29
      $region14: #{memory_vclr_forward.1} parent=11 // pred_check_branch
        %98 = sbr.rel (%p96) target = $region16
      $region15: #{memory_vclr_forward.1} parent=11 // pred_region
        _
      $region16: #{memory_vclr_forward.1} parent=11 // pred_fallthru
        _
    $region12: #{memory_vclr_forward.1} parent=5 // pred_fallthru
      _
    %p99 = scmp.lt.s32.totalorder %s8, 2
    // Predicated region
    $region17: #{memory_vclr_forward.1} parent=5 // pred_check
      %p100 = pneg %p99
    $region18: #{memory_vclr_forward.1} parent=5 // pred_check_branch
      %102 = sbr.rel (%p100) target = $region20
    $region19: #{memory_vclr_forward.1} parent=5 // pred_region
      // Predicated region
      $region21: #{memory_vclr_forward.1} parent=19 // pred_check
        %p103 = pneg %p49
      $region22: #{memory_vclr_forward.1} parent=19 // pred_check_branch
        %105 = sbr.rel (%p103) target = $region24
      $region23: #{memory_vclr_forward.1} parent=19 // pred_region
        %s106 = smul.u32 16, %s8
        %p107 = scmp.lt.s32.totalorder %s106, 31
        %s108 = scalar_select %p107, %s106, 31
        %s109 = smul.addr %s108, 8
        %s110 = scalar_lea.vmem %s1, %s109
        %s111 = smul.u32 16, %s8
      $region24: #{memory_vclr_forward.1} parent=19 // pred_fallthru
        _
    $region20: #{memory_vclr_forward.1} parent=5 // pred_fallthru
      _
    %p112 = scmp.le.s32.totalorder 1, %s8
    %p113 = scmp.lt.s32.totalorder %s8, 3
    %p114 = pnand %p112, %p113
    %p115 = pneg %p114
    // Predicated region
    $region25: #{memory_vclr_forward.1} parent=5 // pred_check
      _
    $region26: #{memory_vclr_forward.1} parent=5 // pred_check_branch
      %117 = sbr.rel (%p114) target = $region28
    $region27: #{memory_vclr_forward.1} parent=5 // pred_region
      %s118 = ssub.s32 %s8, 1
      %p119 = pneg %p29
      %p120 = pneg %p26
      %s121 = smul.u32 16, %s13
      %p122 = scmp.lt.s32.totalorder %s121, 31
      %s123 = scalar_select %p122, %s121, 31
      %s124 = smul.addr %s123, 8
      %s125 = scalar_lea.vmem %s1, %s124
      %p126 = pneg %p55
      %p127 = pneg %p52
      %p128 = pneg %p81
      %p129 = pneg %p78
      %p130 = scmp.lt.s32.totalorder %s13, 1
      %s131 = scalar_select %p130, %s13, 1
      %s132 = smul.addr %s131, 8
      %s133 = scalar_lea.vmem %s2, %s132
      %s134 = smul.u32 16, %s13
      %p135 = scmp.lt.s32.totalorder %s134, 31
      %s136 = scalar_select %p135, %s134, 31
      %s137 = smul.addr %s136, 8
      %s138 = scalar_lea.vmem %s1, %s137
      %s139 = smul.u32 16, %s13
      %p140 = scmp.lt.s32.totalorder %s13, 1
      %s141 = scalar_select %p140, %s13, 1
      %s142 = smul.addr %s141, 8
      %s143 = scalar_lea.vmem %s2, %s142
      %v144 = vld [vmem:[%s0] sm:$0xff]
      %v145 = vld [vmem:[%s138] sm:$0xff]
      %v146 = vld [vmem:[%s138 + $0x8] sm:$0xff]
      %v147 = vld [vmem:[%s138 + $0x10] sm:$0xff]
      %v148 = vld [vmem:[%s138 + $0x18] sm:$0xff]
      %v149 = vld [vmem:[%s138 + $0x20] sm:$0xff]
      %v150 = vld [vmem:[%s138 + $0x28] sm:$0xff]
      %v151 = vld [vmem:[%s138 + $0x30] sm:$0xff]
      %v152 = vld [vmem:[%s138 + $0x38] sm:$0xff]
      %v153 = vld [vmem:[%s138 + $0x40] sm:$0xff]
      %v154 = vld [vmem:[%s138 + $0x48] sm:$0xff]
      %v155 = vld [vmem:[%s138 + $0x50] sm:$0xff]
      %v156 = vld [vmem:[%s138 + $0x58] sm:$0xff]
      %v157 = vld [vmem:[%s138 + $0x60] sm:$0xff]
      %v158 = vld [vmem:[%s138 + $0x68] sm:$0xff]
      %v159 = vld [vmem:[%s138 + $0x70] sm:$0xff]
      %v160 = vld [vmem:[%s138 + $0x78] sm:$0xff]
      %vm161 = vcmask 261120
      %v163 = vsel %vm161, %v144, 0
      %v166 = vsel %vm161, %v145, 0
      %v169 = vsel %vm161, %v146, 0
      %v172 = vsel %vm161, %v147, 0
      %v175 = vsel %vm161, %v148, 0
      %v178 = vsel %vm161, %v149, 0
      %v181 = vsel %vm161, %v150, 0
      %v184 = vsel %vm161, %v151, 0
      %v187 = vsel %vm161, %v152, 0
      %v190 = vsel %vm161, %v153, 0
      %v193 = vsel %vm161, %v154, 0
      %v196 = vsel %vm161, %v155, 0
      %v199 = vsel %vm161, %v156, 0
      %v202 = vsel %vm161, %v157, 0
      %v205 = vsel %vm161, %v158, 0
      %v208 = vsel %vm161, %v159, 0
      %v211 = vsel %vm161, %v160, 0
      %213 = vmatprep.subr.mxu0 0.0
      %214 = vmatpush1.xpose.msra.mxu0 %v166
      %215 = vmatprep.subr.mxu0 0.0
      %216 = vmatpush1.xpose.msra.mxu0 %v169
      %217 = vmatprep.subr.mxu0 0.0
      %218 = vmatpush1.xpose.msra.mxu0 %v172
      %219 = vmatprep.subr.mxu0 0.0
      %220 = vmatpush1.xpose.msra.mxu0 %v175
      %221 = vmatprep.subr.mxu0 0.0
      %222 = vmatpush1.xpose.msra.mxu0 %v178
      %223 = vmatprep.subr.mxu0 0.0
      %224 = vmatpush1.xpose.msra.mxu0 %v181
      %225 = vmatprep.subr.mxu0 0.0
      %226 = vmatpush1.xpose.msra.mxu0 %v184
      %227 = vmatprep.subr.mxu0 0.0
      %228 = vmatpush1.xpose.msra.mxu0 %v187
      %229 = vmatprep.subr.mxu0 0.0
      %230 = vmatpush1.xpose.msra.mxu0 %v190
      %231 = vmatprep.subr.mxu0 0.0
      %232 = vmatpush1.xpose.msra.mxu0 %v193
      %233 = vmatprep.subr.mxu0 0.0
      %234 = vmatpush1.xpose.msra.mxu0 %v196
      %235 = vmatprep.subr.mxu0 0.0
      %236 = vmatpush1.xpose.msra.mxu0 %v199
      %237 = vmatprep.subr.mxu0 0.0
      %238 = vmatpush1.xpose.msra.mxu0 %v202
      %239 = vmatprep.subr.mxu0 0.0
      %240 = vmatpush1.xpose.msra.mxu0 %v205
      %241 = vmatprep.subr.mxu0 0.0
      %242 = vmatpush1.xpose.msra.mxu0 %v208
      %243 = vmatprep.subr.mxu0 0.0
      %244 = vmatpush1.xpose.msra.mxu0 %v211
      %245 = vmatprep.subr.mxu0 0.0
      %246 = vmatpush1.xpose.msra.mxu0 0.0
      %247 = vmatprep.subr.mxu0 0.0
      %248 = vmatpush1.xpose.msra.mxu0 0.0
      %249 = vmatprep.subr.mxu0 0.0
      %250 = vmatpush1.xpose.msra.mxu0 0.0
      %251 = vmatprep.subr.mxu0 0.0
      %252 = vmatpush1.xpose.msra.mxu0 0.0
      %253 = vmatprep.subr.mxu0 0.0
      %254 = vmatpush1.xpose.msra.mxu0 0.0
      %255 = vmatprep.subr.mxu0 0.0
      %256 = vmatpush1.xpose.msra.mxu0 0.0
      %257 = vmatprep.subr.mxu0 0.0
      %258 = vmatpush1.xpose.msra.mxu0 0.0
      %259 = vmatprep.subr.mxu0 0.0
      %260 = vmatpush1.xpose.msra.mxu0 0.0
      %261 = vmatprep.subr.mxu0 0.0
      %262 = vmatpush1.xpose.msra.mxu0 0.0
      %263 = vmatprep.subr.mxu0 0.0
      %264 = vmatpush1.xpose.msra.mxu0 0.0
      %265 = vmatprep.subr.mxu0 0.0
      %266 = vmatpush1.xpose.msra.mxu0 0.0
      %267 = vmatprep.subr.mxu0 0.0
      %268 = vmatpush1.xpose.msra.mxu0 0.0
      %269 = vmatprep.subr.mxu0 0.0
      %270 = vmatpush1.xpose.msra.mxu0 0.0
      %271 = vmatprep.subr.mxu0 0.0
      %272 = vmatpush1.xpose.msra.mxu0 0.0
      %273 = vmatprep.subr.mxu0 0.0
      %274 = vmatpush1.xpose.msra.mxu0 0.0
      %275 = vmatprep.subr.mxu0 0.0
      %276 = vmatpush1.xpose.msra.mxu0 0.0
      %277 = vmatprep.mubr.f32.mxu0 0.0
      %278 = vmatmul.mubr.f32.gmra.mrb[0].mxu0 %v163
      %v279 = vpop.f32.mrb[0].mxu0
      %v280 = vadd.f32 0.0, %v279
      %v281 = vpop.f32.mrb[0].mxu0
      %282 = vdwg.mxu0
      %v283 = vmul.f32 %v280, 10.0
      %284 = vst [vmem:[%s143] sm:$0xff] %v283
      %p285 = scmp.lt.s32.totalorder %s13, 1
      %s286 = scalar_select %p285, %s13, 1
      %s287 = smul.addr %s286, 8
      %s288 = scalar_lea.vmem %s2, %s287
      // Predicated region
      $region29: #{memory_vclr_forward.1} parent=27 // pred_check
        %p289 = pneg %p78
      $region30: #{memory_vclr_forward.1} parent=27 // pred_check_branch
        %291 = sbr.rel (%p289) target = $region32
      $region31: #{memory_vclr_forward.1} parent=27 // pred_region
        _
      $region32: #{memory_vclr_forward.1} parent=27 // pred_fallthru
        _
    $region28: #{memory_vclr_forward.1} parent=5 // pred_fallthru
      _
    %p292 = scmp.le.s32.totalorder 2, %s8
    // Predicated region
    $region33: #{memory_vclr_forward.1} parent=5 // pred_check
      %p293 = pneg %p292
    $region34: #{memory_vclr_forward.1} parent=5 // pred_check_branch
      %295 = sbr.rel (%p293) target = $region36
    $region35: #{memory_vclr_forward.1} parent=5 // pred_region
      %s296 = ssub.s32 %s8, 2
      // Predicated region
      $region37: #{memory_vclr_forward.1} parent=35 // pred_check
        %p297 = pneg %p84
      $region38: #{memory_vclr_forward.1} parent=35 // pred_check_branch
        %299 = sbr.rel (%p297) target = $region40
      $region39: #{memory_vclr_forward.1} parent=35 // pred_region
        %p300 = scmp.lt.s32.totalorder %s14, 1
        %s301 = scalar_select %p300, %s14, 1
        %s302 = smul.addr %s301, 8
        %s303 = scalar_lea.vmem %s2, %s302
      $region40: #{memory_vclr_forward.1} parent=35 // pred_fallthru
        _
    $region36: #{memory_vclr_forward.1} parent=5 // pred_fallthru
      _
  $region6: #{memory_vclr_forward.1} parent=0 // loop_footer
    %s12 = sadd.s32 1, %s8
  $region7: #{memory_vclr_forward.1} parent=0 // loop_footer_branch
    %7 = sbr.rel target = $region3
  $region8: #{memory_vclr_forward.1} parent=0 // loop_exit
    _

</llo_original>
